<compile_context>
chip_gen: v6e
topology: v6e:2x2x1
jax: 0.10.0
libtpu: 0.0.40
codegen_flags: <defaults>
</compile_context>

<pallas_src>
import functools

import numpy as np
import jax
import jax.numpy as jnp
from jax import lax
from jax.experimental import pallas as pl
from jax.experimental.pallas import tpu as pltpu


# ----------------------------------------------------------------------------
# Constant helpers (built once with numpy, cached per spatial shape)
# ----------------------------------------------------------------------------
@functools.lru_cache(maxsize=None)
def _make_masks(Hg, Wg):
    """(9, Hg*Wg) f32 validity masks, one per 3x3 tap (zero-padding borders)."""
    i = np.arange(Hg)[:, None]
    j = np.arange(Wg)[None, :]
    masks = []
    for kh in range(3):
        for kw in range(3):
            dh, dw = kh - 1, kw - 1
            valid = ((i + dh >= 0) & (i + dh < Hg) &
                     (j + dw >= 0) & (j + dw < Wg))
            masks.append(valid.reshape(-1))
    return jnp.asarray(np.stack(masks).astype(np.float32))


@functools.lru_cache(maxsize=None)
def _make_subsample(Hg, Wg):
    """(Hg*Wg, (Hg//2)*(Wg//2)) 0/1 matrix realizing x[..., ::2, ::2] flattened."""
    Ho, Wo = Hg // 2, Wg // 2
    sel = np.zeros((Hg * Wg, Ho * Wo), np.float32)
    for a in range(Ho):
        for b in range(Wo):
            sel[(2 * a) * Wg + 2 * b, a * Wo + b] = 1.0
    return jnp.asarray(sel)


@functools.lru_cache(maxsize=None)
def _make_chpad(cin, cout, pad_lo):
    """(cout, cin) 0/1 matrix realizing the shortcut's zero channel padding."""
    P = np.zeros((cout, cin), np.float32)
    for c in range(cin):
        P[c + pad_lo, c] = 1.0
    return jnp.asarray(P)


# ----------------------------------------------------------------------------
# In-kernel building block: 3x3 "same" conv as one im2col matmul
# ----------------------------------------------------------------------------
def _conv3x3_flat(x, w_ref, b_ref, m_ref, Wg, use_bf16):
    """x: (C, Hg*Wg) channels-first flattened activation.
    w_ref: (Co, 9*C) BN-folded weights (bf16 if use_bf16), b_ref: (Co, 1) f32,
    m_ref: (9, Hg*Wg) border masks.
    Returns (Co, Hg*Wg) f32 = conv3x3(pad=1) + bias (BN folded in w/b)."""
    C, HWg = x.shape
    taps = []
    for kh in range(3):
        for kw in range(3):
            t_idx = kh * 3 + kw
            s = (kh - 1) * Wg + (kw - 1)          # flat spatial offset of this tap
            if s == 0:
                taps.append(x)                     # centre tap: no shift, no mask
            else:
                shifted = jnp.roll(x, -s, axis=1)  # static lane rotation (XLU)
                taps.append(shifted * m_ref[t_idx:t_idx + 1, :])
    # im2col with K = 9*C: one large MXU contraction instead of 9 tiny ones.
    # (taps are ordered (kh, kw, cin), matching the folded weight layout.)
    patches = jnp.concatenate(taps, axis=0)        # (9*C, HWg)
    if use_bf16:                                   # weights already bf16;
        patches = patches.astype(jnp.bfloat16)     # f32 accumulation below.
    out = jnp.dot(w_ref[...], patches, preferred_element_type=jnp.float32)
    return out + b_ref[...]                        # (Co, 1) broadcast over lanes


# ----------------------------------------------------------------------------
# Fused BasicBlock kernels (one batch element per grid step)
# ----------------------------------------------------------------------------
def _basic_block_kernel_identity(x_ref, w1_ref, b1_ref, w2_ref, b2_ref,
                                 m1_ref, o_ref, *, W, use_bf16):
    x = x_ref[0]                                                   # (Cin, H*W)
    out1 = jnp.clip(_conv3x3_flat(x, w1_ref, b1_ref, m1_ref, W, use_bf16),
                    0.0, 6.0)
    out2 = _conv3x3_flat(out1, w2_ref, b2_ref, m1_ref, W, use_bf16)
    o_ref[0] = jnp.clip(out2 + x, 0.0, 6.0).astype(o_ref.dtype)


def _basic_block_kernel_downsample(x_ref, w1_ref, b1_ref, w2_ref, b2_ref,
                                   m1_ref, m2_ref, sel_ref, chpad_ref, o_ref,
                                   *, W, Wo, use_bf16):
    x = x_ref[0]                                                   # (Cin, H*W)
    # conv1 + bn1 + relu6 at full resolution; the stride-2 subsample is fused
    # in-VMEM as a 0/1 selection matmul on the MXU (no HBM round trip, no
    # separate XLA subsample op, no strided-slice relayout).
    out1 = jnp.clip(_conv3x3_flat(x, w1_ref, b1_ref, m1_ref, W, use_bf16),
                    0.0, 6.0)
    sel = sel_ref[...]
    out1 = jnp.dot(out1, sel, preferred_element_type=jnp.float32)  # (Cout, Ho*Wo)
    # conv2 + bn2 on the subsampled grid.
    out2 = _conv3x3_flat(out1, w2_ref, b2_ref, m2_ref, Wo, use_bf16)
    # shortcut = channel-zero-pad(x[:, :, ::2, ::2]), fused via two tiny matmuls.
    sc = jnp.dot(x, sel, preferred_element_type=jnp.float32)       # (Cin, Ho*Wo)
    sc = jnp.dot(chpad_ref[...], sc, preferred_element_type=jnp.float32)
    o_ref[0] = jnp.clip(out2 + sc, 0.0, 6.0).astype(o_ref.dtype)


# ----------------------------------------------------------------------------
# BasicBlock wrapper
# ----------------------------------------------------------------------------
class BasicBlockPallas:
    expansion = 1

    def __init__(self, inp, outp, stride=1, key=None, use_bf16_matmul=False):
        assert stride in (1, 2), "only stride 1 / 2 supported (as used by the net)"
        self.inp, self.outp, self.stride = inp, outp, stride
        self.use_bf16 = use_bf16_matmul
        self.downsample = (stride != 1 or inp != outp)
        if self.downsample:
            # Shortcut shapes only line up when stride == 2 and
            # outp == inp + 2 * (outp // 4)  (the net always uses outp == 2*inp).
            assert stride == 2 and inp + 2 * (outp // 4) == outp

        if key is None:
            key = jax.random.PRNGKey(0)
        ks = jax.random.split(key, 4)
        eps = 1e-5

        def bn_params(k):
            k1, k2, k3, k4 = jax.random.split(k, 4)
            gamma = 1.0 + 0.1 * jax.random.normal(k1, (outp,), jnp.float32)
            beta = 0.1 * jax.random.normal(k2, (outp,), jnp.float32)
            mean = 0.1 * jax.random.normal(k3, (outp,), jnp.float32)
            var = jax.random.uniform(k4, (outp,), jnp.float32, 0.5, 1.5)
            scale = gamma * lax.rsqrt(var + eps)
            bias = beta - mean * scale
            return scale, bias

        # Conv weights in PyTorch layout (Cout, Cin, 3, 3), no bias.
        self.w1_oihw = 0.1 * jax.random.normal(ks[0], (outp, inp, 3, 3), jnp.float32)
        self.w2_oihw = 0.1 * jax.random.normal(ks[1], (outp, outp, 3, 3), jnp.float32)
        # Inference-mode BatchNorm folded to per-channel scale / bias.
        self.scale1, self.bias1 = bn_params(ks[2])
        self.scale2, self.bias2 = bn_params(ks[3])

        # Kernel layouts: (Cout, 9*Cin) with K ordered (kh, kw, cin) to match
        # the in-kernel tap concatenation; BN scale folded into the weights so
        # the kernel epilogue is just  + bias ; clip.  Pre-cast to bf16 when
        # requested (halves weight DMA, removes in-kernel weight casts).
        w_dtype = jnp.bfloat16 if self.use_bf16 else jnp.float32

        def fold(w_oihw, scale):
            w2d = jnp.transpose(w_oihw, (0, 2, 3, 1)).reshape(w_oihw.shape[0], -1)
            return (w2d * scale[:, None]).astype(w_dtype)

        self.w1_k = fold(self.w1_oihw, self.scale1)      # (Cout, 9*Cin)
        self.w2_k = fold(self.w2_oihw, self.scale2)      # (Cout, 9*Cout)
        self.b1_k = self.bias1.reshape(outp, 1)          # f32 (post-MXU add)
        self.b2_k = self.bias2.reshape(outp, 1)
        self.chpad_k = _make_chpad(inp, outp, outp // 4) if self.downsample else None

    def __call__(self, x_nchw):
        N, Cin, H, W = x_nchw.shape
        assert Cin == self.inp
        Cout = self.outp
        if self.downsample:
            assert H % 2 == 0 and W % 2 == 0
            Ho, Wo = H // 2, W // 2
        else:
            Ho, Wo = H, W
        HW, HoWo = H * W, Ho * Wo

        # Channels-first flattened-spatial layout: lane dim = H*W (dense).
        # Free metadata reshape at the XLA level, no transposes needed.
        x_flat = x_nchw.reshape(N, Cin, HW)
        m1 = _make_masks(H, W)
        w_dtype = self.w1_k.dtype

        in_specs = [
            pl.BlockSpec((1, Cin, HW), lambda n: (n, 0, 0)),
            pl.BlockSpec((Cout, 9 * Cin), lambda n: (0, 0)),
            pl.BlockSpec((Cout, 1), lambda n: (0, 0)),
            pl.BlockSpec((Cout, 9 * Cout), lambda n: (0, 0)),
            pl.BlockSpec((Cout, 1), lambda n: (0, 0)),
            pl.BlockSpec((9, HW), lambda n: (0, 0)),
        ]
        args = [x_flat, self.w1_k, self.b1_k, self.w2_k, self.b2_k, m1]

        if self.downsample:
            m2 = _make_masks(Ho, Wo)
            sel = _make_subsample(H, W)
            in_specs += [
                pl.BlockSpec((9, HoWo), lambda n: (0, 0)),
                pl.BlockSpec((HW, HoWo), lambda n: (0, 0)),
                pl.BlockSpec((Cout, Cin), lambda n: (0, 0)),
            ]
            args += [m2, sel, self.chpad_k]
            kernel = functools.partial(_basic_block_kernel_downsample,
                                       W=W, Wo=Wo,
                                       use_bf16=(w_dtype == jnp.bfloat16))
        else:
            kernel = functools.partial(_basic_block_kernel_identity,
                                       W=W, use_bf16=(w_dtype == jnp.bfloat16))

        out_flat = pl.pallas_call(
            kernel,
            out_shape=jax.ShapeDtypeStruct((N, Cout, HoWo), x_nchw.dtype),
            grid_spec=pltpu.PrefetchScalarGridSpec(
                num_scalar_prefetch=0,
                grid=(N,),
                in_specs=in_specs,
                out_specs=pl.BlockSpec((1, Cout, HoWo), lambda n: (n, 0, 0)),
            ),
            compiler_params=pltpu.CompilerParams(
                dimension_semantics=("parallel",),
                vmem_limit_bytes=32 * 1024 * 1024,
            ),
        )(*args)
        return out_flat.reshape(N, Cout, Ho, Wo)


# ----------------------------------------------------------------------------
# Pure-JAX reference (independent path, for correctness check)
# ----------------------------------------------------------------------------
def reference_forward(block, x_nchw):
    def conv(x, w, stride):
        return lax.conv_general_dilated(
            x, w, (stride, stride), ((1, 1), (1, 1)),
            dimension_numbers=("NCHW", "OIHW", "NCHW"))

    def bn(x, scale, bias):
        return x * scale[None, :, None, None] + bias[None, :, None, None]

    out = jnp.clip(bn(conv(x_nchw, block.w1_oihw, block.stride),
                      block.scale1, block.bias1), 0.0, 6.0)
    out = bn(conv(out, block.w2_oihw, 1), block.scale2, block.bias2)
    if block.stride != 1 or block.inp != block.outp:
        p = block.outp // 4
        sc = jnp.pad(x_nchw[:, :, ::2, ::2], ((0, 0), (p, p), (0, 0), (0, 0)))
    else:
        sc = x_nchw
    return jnp.clip(out + sc, 0.0, 6.0)


# ----------------------------------------------------------------------------
if __name__ == "__main__":
    key = jax.random.PRNGKey(0)
    kx, kb1, kb2 = jax.random.split(key, 3)
    x = jax.random.normal(kx, (2, 4, 16, 16), jnp.float32)   # NCHW, like PyTorch

    # Case 1: stride=1, inp==outp  -> identity shortcut.
    blk1 = BasicBlockPallas(4, 4, stride=1, key=kb1)
    y1 = jax.block_until_ready(blk1(x))
    r1 = reference_forward(blk1, x)
    np.testing.assert_allclose(np.asarray(y1), np.asarray(r1),
                               rtol=1e-2, atol=1e-2)
    assert y1.shape == (2, 4, 16, 16)

    # Case 2: stride=2, inp != outp -> LambdaLayer subsample + channel-pad shortcut.
    blk2 = BasicBlockPallas(4, 8, stride=2, key=kb2)
    y2 = jax.block_until_ready(blk2(x))
    r2 = reference_forward(blk2, x)
    np.testing.assert_allclose(np.asarray(y2), np.asarray(r2),
                               rtol=1e-2, atol=1e-2)
    assert y2.shape == (2, 8, 8, 8)

    # bf16 MXU inputs (v6e/v7x-oriented), f32 accumulation + f32 epilogue.
    blk3 = BasicBlockPallas(4, 8, stride=2, key=kb2, use_bf16_matmul=True)
    y3 = jax.block_until_ready(blk3(x))
    np.testing.assert_allclose(np.asarray(y3), np.asarray(r2),
                               rtol=1e-1, atol=1e-1)

    print("KERNEL_OK")
</pallas_src>

<mosaic_0001>
module attributes {stable_mosaic.version = 11 : i64} {
  func.func @_basic_block_kernel_identity(%arg0: i32, %arg1: memref<1x4x256xf32, #tpu.memory_space<vmem>>, %arg2: memref<4x36xf32, #tpu.memory_space<vmem>>, %arg3: memref<4x1xf32, #tpu.memory_space<vmem>>, %arg4: memref<4x36xf32, #tpu.memory_space<vmem>>, %arg5: memref<4x1xf32, #tpu.memory_space<vmem>>, %arg6: memref<9x256xf32, #tpu.memory_space<vmem>>, %arg7: memref<1x4x256xf32, #tpu.memory_space<vmem>>) attributes {dimension_semantics = [#tpu.dimension_semantics<parallel>], iteration_bounds = array<i64: 2>, scalar_prefetch = 0 : i64, scratch_operands = 0 : i64, tpu.core_type = #tpu.core_type<tc>, window_params = [{transform_indices = @transform_0, window_bounds = array<i64: 1, 4, 256>}, {pipeline_mode = #tpu.pipeline_mode<synchronous>, transform_indices = @transform_1, window_bounds = array<i64: 4, 36>}, {pipeline_mode = #tpu.pipeline_mode<synchronous>, transform_indices = @transform_2, window_bounds = array<i64: 4, 1>}, {pipeline_mode = #tpu.pipeline_mode<synchronous>, transform_indices = @transform_3, window_bounds = array<i64: 4, 36>}, {pipeline_mode = #tpu.pipeline_mode<synchronous>, transform_indices = @transform_4, window_bounds = array<i64: 4, 1>}, {pipeline_mode = #tpu.pipeline_mode<synchronous>, transform_indices = @transform_5, window_bounds = array<i64: 9, 256>}, {transform_indices = @transform_6, window_bounds = array<i64: 1, 4, 256>}]} {
    %c0 = arith.constant 0 : index
    %c0_0 = arith.constant 0 : index
    %c0_1 = arith.constant 0 : index
    %0 = vector.load %arg1[%c0, %c0_0, %c0_1] : memref<1x4x256xf32, #tpu.memory_space<vmem>>, vector<1x4x256xf32>
    %1 = vector.shape_cast %0 : vector<1x4x256xf32> to vector<4x256xf32>
    %2 = vector.extract_strided_slice %1 {offsets = [0, 239], sizes = [4, 17], strides = [1, 1]} : vector<4x256xf32> to vector<4x17xf32>
    %3 = vector.extract_strided_slice %1 {offsets = [0, 0], sizes = [4, 239], strides = [1, 1]} : vector<4x256xf32> to vector<4x239xf32>
    %4 = tpu.concatenate %2, %3 in 1 : vector<4x17xf32>, vector<4x239xf32> -> vector<4x256xf32>
    %c0_2 = arith.constant 0 : index
    %c0_3 = arith.constant 0 : index
    %5 = vector.load %arg6[%c0_2, %c0_3] : memref<9x256xf32, #tpu.memory_space<vmem>>, vector<1x256xf32>
    %6 = vector.broadcast %5 : vector<1x256xf32> to vector<4x256xf32>
    %7 = arith.mulf %4, %6 : vector<4x256xf32>
    %8 = vector.extract_strided_slice %1 {offsets = [0, 240], sizes = [4, 16], strides = [1, 1]} : vector<4x256xf32> to vector<4x16xf32>
    %9 = vector.extract_strided_slice %1 {offsets = [0, 0], sizes = [4, 240], strides = [1, 1]} : vector<4x256xf32> to vector<4x240xf32>
    %10 = tpu.concatenate %8, %9 in 1 : vector<4x16xf32>, vector<4x240xf32> -> vector<4x256xf32>
    %c1 = arith.constant 1 : index
    %c0_4 = arith.constant 0 : index
    %11 = vector.load %arg6[%c1, %c0_4] : memref<9x256xf32, #tpu.memory_space<vmem>>, vector<1x256xf32>
    %12 = vector.broadcast %11 : vector<1x256xf32> to vector<4x256xf32>
    %13 = arith.mulf %10, %12 : vector<4x256xf32>
    %14 = vector.extract_strided_slice %1 {offsets = [0, 241], sizes = [4, 15], strides = [1, 1]} : vector<4x256xf32> to vector<4x15xf32>
    %15 = vector.extract_strided_slice %1 {offsets = [0, 0], sizes = [4, 241], strides = [1, 1]} : vector<4x256xf32> to vector<4x241xf32>
    %16 = tpu.concatenate %14, %15 in 1 : vector<4x15xf32>, vector<4x241xf32> -> vector<4x256xf32>
    %c2 = arith.constant 2 : index
    %c0_5 = arith.constant 0 : index
    %17 = vector.load %arg6[%c2, %c0_5] : memref<9x256xf32, #tpu.memory_space<vmem>>, vector<1x256xf32>
    %18 = vector.broadcast %17 : vector<1x256xf32> to vector<4x256xf32>
    %19 = arith.mulf %16, %18 : vector<4x256xf32>
    %20 = vector.extract_strided_slice %1 {offsets = [0, 255], sizes = [4, 1], strides = [1, 1]} : vector<4x256xf32> to vector<4x1xf32>
    %21 = vector.extract_strided_slice %1 {offsets = [0, 0], sizes = [4, 255], strides = [1, 1]} : vector<4x256xf32> to vector<4x255xf32>
    %22 = tpu.concatenate %20, %21 in 1 : vector<4x1xf32>, vector<4x255xf32> -> vector<4x256xf32>
    %c3 = arith.constant 3 : index
    %c0_6 = arith.constant 0 : index
    %23 = vector.load %arg6[%c3, %c0_6] : memref<9x256xf32, #tpu.memory_space<vmem>>, vector<1x256xf32>
    %24 = vector.broadcast %23 : vector<1x256xf32> to vector<4x256xf32>
    %25 = arith.mulf %22, %24 : vector<4x256xf32>
    %26 = vector.extract_strided_slice %1 {offsets = [0, 1], sizes = [4, 255], strides = [1, 1]} : vector<4x256xf32> to vector<4x255xf32>
    %27 = vector.extract_strided_slice %1 {offsets = [0, 0], sizes = [4, 1], strides = [1, 1]} : vector<4x256xf32> to vector<4x1xf32>
    %28 = tpu.concatenate %26, %27 in 1 : vector<4x255xf32>, vector<4x1xf32> -> vector<4x256xf32>
    %c5 = arith.constant 5 : index
    %c0_7 = arith.constant 0 : index
    %29 = vector.load %arg6[%c5, %c0_7] : memref<9x256xf32, #tpu.memory_space<vmem>>, vector<1x256xf32>
    %30 = vector.broadcast %29 : vector<1x256xf32> to vector<4x256xf32>
    %31 = arith.mulf %28, %30 : vector<4x256xf32>
    %32 = vector.extract_strided_slice %1 {offsets = [0, 15], sizes = [4, 241], strides = [1, 1]} : vector<4x256xf32> to vector<4x241xf32>
    %33 = vector.extract_strided_slice %1 {offsets = [0, 0], sizes = [4, 15], strides = [1, 1]} : vector<4x256xf32> to vector<4x15xf32>
    %34 = tpu.concatenate %32, %33 in 1 : vector<4x241xf32>, vector<4x15xf32> -> vector<4x256xf32>
    %c6 = arith.constant 6 : index
    %c0_8 = arith.constant 0 : index
    %35 = vector.load %arg6[%c6, %c0_8] : memref<9x256xf32, #tpu.memory_space<vmem>>, vector<1x256xf32>
    %36 = vector.broadcast %35 : vector<1x256xf32> to vector<4x256xf32>
    %37 = arith.mulf %34, %36 : vector<4x256xf32>
    %38 = vector.extract_strided_slice %1 {offsets = [0, 16], sizes = [4, 240], strides = [1, 1]} : vector<4x256xf32> to vector<4x240xf32>
    %39 = vector.extract_strided_slice %1 {offsets = [0, 0], sizes = [4, 16], strides = [1, 1]} : vector<4x256xf32> to vector<4x16xf32>
    %40 = tpu.concatenate %38, %39 in 1 : vector<4x240xf32>, vector<4x16xf32> -> vector<4x256xf32>
    %c7 = arith.constant 7 : index
    %c0_9 = arith.constant 0 : index
    %41 = vector.load %arg6[%c7, %c0_9] : memref<9x256xf32, #tpu.memory_space<vmem>>, vector<1x256xf32>
    %42 = vector.broadcast %41 : vector<1x256xf32> to vector<4x256xf32>
    %43 = arith.mulf %40, %42 : vector<4x256xf32>
    %44 = vector.extract_strided_slice %1 {offsets = [0, 17], sizes = [4, 239], strides = [1, 1]} : vector<4x256xf32> to vector<4x239xf32>
    %45 = vector.extract_strided_slice %1 {offsets = [0, 0], sizes = [4, 17], strides = [1, 1]} : vector<4x256xf32> to vector<4x17xf32>
    %46 = tpu.concatenate %44, %45 in 1 : vector<4x239xf32>, vector<4x17xf32> -> vector<4x256xf32>
    %c8 = arith.constant 8 : index
    %c0_10 = arith.constant 0 : index
    %47 = vector.load %arg6[%c8, %c0_10] : memref<9x256xf32, #tpu.memory_space<vmem>>, vector<1x256xf32>
    %48 = vector.broadcast %47 : vector<1x256xf32> to vector<4x256xf32>
    %49 = arith.mulf %46, %48 : vector<4x256xf32>
    %50 = tpu.concatenate %7, %13, %19, %25, %1, %31, %37, %43, %49 in 0 : vector<4x256xf32>, vector<4x256xf32>, vector<4x256xf32>, vector<4x256xf32>, vector<4x256xf32>, vector<4x256xf32>, vector<4x256xf32>, vector<4x256xf32>, vector<4x256xf32> -> vector<36x256xf32>
    %c0_11 = arith.constant 0 : index
    %c0_12 = arith.constant 0 : index
    %51 = vector.load %arg2[%c0_11, %c0_12] : memref<4x36xf32, #tpu.memory_space<vmem>>, vector<4x36xf32>
    %cst = arith.constant dense<0.000000e+00> : vector<4x256xf32>
    %52 = tpu.matmul %51, %50, %cst {dimension_numbers = #tpu.dot_dimension_numbers<[1], [0], [0], [1], [0, 0, 1, 1], [], []>} : vector<4x36xf32>, vector<36x256xf32>, vector<4x256xf32> -> vector<4x256xf32>
    %c0_13 = arith.constant 0 : index
    %c0_14 = arith.constant 0 : index
    %53 = vector.load %arg3[%c0_13, %c0_14] : memref<4x1xf32, #tpu.memory_space<vmem>>, vector<4x1xf32>
    %54 = vector.broadcast %53 : vector<4x1xf32> to vector<4x256xf32>
    %55 = arith.addf %52, %54 : vector<4x256xf32>
    %cst_15 = arith.constant 0.000000e+00 : f32
    %cst_16 = arith.constant 6.000000e+00 : f32
    %56 = vector.broadcast %cst_15 : f32 to vector<4x256xf32>
    %57 = arith.maximumf %56, %55 : vector<4x256xf32>
    %58 = vector.broadcast %cst_16 : f32 to vector<4x256xf32>
    %59 = arith.minimumf %58, %57 : vector<4x256xf32>
    %60 = vector.extract_strided_slice %59 {offsets = [0, 239], sizes = [4, 17], strides = [1, 1]} : vector<4x256xf32> to vector<4x17xf32>
    %61 = vector.extract_strided_slice %59 {offsets = [0, 0], sizes = [4, 239], strides = [1, 1]} : vector<4x256xf32> to vector<4x239xf32>
    %62 = tpu.concatenate %60, %61 in 1 : vector<4x17xf32>, vector<4x239xf32> -> vector<4x256xf32>
    %c0_17 = arith.constant 0 : index
    %c0_18 = arith.constant 0 : index
    %63 = vector.load %arg6[%c0_17, %c0_18] : memref<9x256xf32, #tpu.memory_space<vmem>>, vector<1x256xf32>
    %64 = vector.broadcast %63 : vector<1x256xf32> to vector<4x256xf32>
    %65 = arith.mulf %62, %64 : vector<4x256xf32>
    %66 = vector.extract_strided_slice %59 {offsets = [0, 240], sizes = [4, 16], strides = [1, 1]} : vector<4x256xf32> to vector<4x16xf32>
    %67 = vector.extract_strided_slice %59 {offsets = [0, 0], sizes = [4, 240], strides = [1, 1]} : vector<4x256xf32> to vector<4x240xf32>
    %68 = tpu.concatenate %66, %67 in 1 : vector<4x16xf32>, vector<4x240xf32> -> vector<4x256xf32>
    %c1_19 = arith.constant 1 : index
    %c0_20 = arith.constant 0 : index
    %69 = vector.load %arg6[%c1_19, %c0_20] : memref<9x256xf32, #tpu.memory_space<vmem>>, vector<1x256xf32>
    %70 = vector.broadcast %69 : vector<1x256xf32> to vector<4x256xf32>
    %71 = arith.mulf %68, %70 : vector<4x256xf32>
    %72 = vector.extract_strided_slice %59 {offsets = [0, 241], sizes = [4, 15], strides = [1, 1]} : vector<4x256xf32> to vector<4x15xf32>
    %73 = vector.extract_strided_slice %59 {offsets = [0, 0], sizes = [4, 241], strides = [1, 1]} : vector<4x256xf32> to vector<4x241xf32>
    %74 = tpu.concatenate %72, %73 in 1 : vector<4x15xf32>, vector<4x241xf32> -> vector<4x256xf32>
    %c2_21 = arith.constant 2 : index
    %c0_22 = arith.constant 0 : index
    %75 = vector.load %arg6[%c2_21, %c0_22] : memref<9x256xf32, #tpu.memory_space<vmem>>, vector<1x256xf32>
    %76 = vector.broadcast %75 : vector<1x256xf32> to vector<4x256xf32>
    %77 = arith.mulf %74, %76 : vector<4x256xf32>
    %78 = vector.extract_strided_slice %59 {offsets = [0, 255], sizes = [4, 1], strides = [1, 1]} : vector<4x256xf32> to vector<4x1xf32>
    %79 = vector.extract_strided_slice %59 {offsets = [0, 0], sizes = [4, 255], strides = [1, 1]} : vector<4x256xf32> to vector<4x255xf32>
    %80 = tpu.concatenate %78, %79 in 1 : vector<4x1xf32>, vector<4x255xf32> -> vector<4x256xf32>
    %c3_23 = arith.constant 3 : index
    %c0_24 = arith.constant 0 : index
    %81 = vector.load %arg6[%c3_23, %c0_24] : memref<9x256xf32, #tpu.memory_space<vmem>>, vector<1x256xf32>
    %82 = vector.broadcast %81 : vector<1x256xf32> to vector<4x256xf32>
    %83 = arith.mulf %80, %82 : vector<4x256xf32>
    %84 = vector.extract_strided_slice %59 {offsets = [0, 1], sizes = [4, 255], strides = [1, 1]} : vector<4x256xf32> to vector<4x255xf32>
    %85 = vector.extract_strided_slice %59 {offsets = [0, 0], sizes = [4, 1], strides = [1, 1]} : vector<4x256xf32> to vector<4x1xf32>
    %86 = tpu.concatenate %84, %85 in 1 : vector<4x255xf32>, vector<4x1xf32> -> vector<4x256xf32>
    %c5_25 = arith.constant 5 : index
    %c0_26 = arith.constant 0 : index
    %87 = vector.load %arg6[%c5_25, %c0_26] : memref<9x256xf32, #tpu.memory_space<vmem>>, vector<1x256xf32>
    %88 = vector.broadcast %87 : vector<1x256xf32> to vector<4x256xf32>
    %89 = arith.mulf %86, %88 : vector<4x256xf32>
    %90 = vector.extract_strided_slice %59 {offsets = [0, 15], sizes = [4, 241], strides = [1, 1]} : vector<4x256xf32> to vector<4x241xf32>
    %91 = vector.extract_strided_slice %59 {offsets = [0, 0], sizes = [4, 15], strides = [1, 1]} : vector<4x256xf32> to vector<4x15xf32>
    %92 = tpu.concatenate %90, %91 in 1 : vector<4x241xf32>, vector<4x15xf32> -> vector<4x256xf32>
    %c6_27 = arith.constant 6 : index
    %c0_28 = arith.constant 0 : index
    %93 = vector.load %arg6[%c6_27, %c0_28] : memref<9x256xf32, #tpu.memory_space<vmem>>, vector<1x256xf32>
    %94 = vector.broadcast %93 : vector<1x256xf32> to vector<4x256xf32>
    %95 = arith.mulf %92, %94 : vector<4x256xf32>
    %96 = vector.extract_strided_slice %59 {offsets = [0, 16], sizes = [4, 240], strides = [1, 1]} : vector<4x256xf32> to vector<4x240xf32>
    %97 = vector.extract_strided_slice %59 {offsets = [0, 0], sizes = [4, 16], strides = [1, 1]} : vector<4x256xf32> to vector<4x16xf32>
    %98 = tpu.concatenate %96, %97 in 1 : vector<4x240xf32>, vector<4x16xf32> -> vector<4x256xf32>
    %c7_29 = arith.constant 7 : index
    %c0_30 = arith.constant 0 : index
    %99 = vector.load %arg6[%c7_29, %c0_30] : memref<9x256xf32, #tpu.memory_space<vmem>>, vector<1x256xf32>
    %100 = vector.broadcast %99 : vector<1x256xf32> to vector<4x256xf32>
    %101 = arith.mulf %98, %100 : vector<4x256xf32>
    %102 = vector.extract_strided_slice %59 {offsets = [0, 17], sizes = [4, 239], strides = [1, 1]} : vector<4x256xf32> to vector<4x239xf32>
    %103 = vector.extract_strided_slice %59 {offsets = [0, 0], sizes = [4, 17], strides = [1, 1]} : vector<4x256xf32> to vector<4x17xf32>
    %104 = tpu.concatenate %102, %103 in 1 : vector<4x239xf32>, vector<4x17xf32> -> vector<4x256xf32>
    %c8_31 = arith.constant 8 : index
    %c0_32 = arith.constant 0 : index
    %105 = vector.load %arg6[%c8_31, %c0_32] : memref<9x256xf32, #tpu.memory_space<vmem>>, vector<1x256xf32>
    %106 = vector.broadcast %105 : vector<1x256xf32> to vector<4x256xf32>
    %107 = arith.mulf %104, %106 : vector<4x256xf32>
    %108 = tpu.concatenate %65, %71, %77, %83, %59, %89, %95, %101, %107 in 0 : vector<4x256xf32>, vector<4x256xf32>, vector<4x256xf32>, vector<4x256xf32>, vector<4x256xf32>, vector<4x256xf32>, vector<4x256xf32>, vector<4x256xf32>, vector<4x256xf32> -> vector<36x256xf32>
    %c0_33 = arith.constant 0 : index
    %c0_34 = arith.constant 0 : index
    %109 = vector.load %arg4[%c0_33, %c0_34] : memref<4x36xf32, #tpu.memory_space<vmem>>, vector<4x36xf32>
    %cst_35 = arith.constant dense<0.000000e+00> : vector<4x256xf32>
    %110 = tpu.matmul %109, %108, %cst_35 {dimension_numbers = #tpu.dot_dimension_numbers<[1], [0], [0], [1], [0, 0, 1, 1], [], []>} : vector<4x36xf32>, vector<36x256xf32>, vector<4x256xf32> -> vector<4x256xf32>
    %c0_36 = arith.constant 0 : index
    %c0_37 = arith.constant 0 : index
    %111 = vector.load %arg5[%c0_36, %c0_37] : memref<4x1xf32, #tpu.memory_space<vmem>>, vector<4x1xf32>
    %112 = vector.broadcast %111 : vector<4x1xf32> to vector<4x256xf32>
    %113 = arith.addf %110, %112 : vector<4x256xf32>
    %114 = arith.addf %113, %1 : vector<4x256xf32>
    %cst_38 = arith.constant 0.000000e+00 : f32
    %cst_39 = arith.constant 6.000000e+00 : f32
    %115 = vector.broadcast %cst_38 : f32 to vector<4x256xf32>
    %116 = arith.maximumf %115, %114 : vector<4x256xf32>
    %117 = vector.broadcast %cst_39 : f32 to vector<4x256xf32>
    %118 = arith.minimumf %117, %116 : vector<4x256xf32>
    %c0_40 = arith.constant 0 : index
    %c0_41 = arith.constant 0 : index
    %c0_42 = arith.constant 0 : index
    %119 = vector.load %arg7[%c0_40, %c0_41, %c0_42] : memref<1x4x256xf32, #tpu.memory_space<vmem>>, vector<1x4x256xf32>
    %120 = vector.shape_cast %119 : vector<1x4x256xf32> to vector<4x256xf32>
    %121 = vector.shape_cast %118 : vector<4x256xf32> to vector<1x4x256xf32>
    tpu.vector_store %arg7[%c0_40, %c0_41, %c0_42], %121 {strides = array<i32>} : memref<1x4x256xf32, #tpu.memory_space<vmem>>, vector<1x4x256xf32>,
    return
  }
  func.func @transform_0(%arg0: i32) -> (i32, i32, i32) {
    %c0_i32 = arith.constant 0 : i32
    %c0_i32_0 = arith.constant 0 : i32
    %c0_i32_1 = arith.constant 0 : i32
    return %arg0, %c0_i32, %c0_i32_0 : i32, i32, i32
  }
  func.func @transform_1(%arg0: i32) -> (i32, i32) {
    %c0_i32 = arith.constant 0 : i32
    %c0_i32_0 = arith.constant 0 : i32
    %c0_i32_1 = arith.constant 0 : i32
    return %c0_i32, %c0_i32_0 : i32, i32
  }
  func.func @transform_2(%arg0: i32) -> (i32, i32) {
    %c0_i32 = arith.constant 0 : i32
    %c0_i32_0 = arith.constant 0 : i32
    %c0_i32_1 = arith.constant 0 : i32
    return %c0_i32, %c0_i32_0 : i32, i32
  }
  func.func @transform_3(%arg0: i32) -> (i32, i32) {
    %c0_i32 = arith.constant 0 : i32
    %c0_i32_0 = arith.constant 0 : i32
    %c0_i32_1 = arith.constant 0 : i32
    return %c0_i32, %c0_i32_0 : i32, i32
  }
  func.func @transform_4(%arg0: i32) -> (i32, i32) {
    %c0_i32 = arith.constant 0 : i32
    %c0_i32_0 = arith.constant 0 : i32
    %c0_i32_1 = arith.constant 0 : i32
    return %c0_i32, %c0_i32_0 : i32, i32
  }
  func.func @transform_5(%arg0: i32) -> (i32, i32) {
    %c0_i32 = arith.constant 0 : i32
    %c0_i32_0 = arith.constant 0 : i32
    %c0_i32_1 = arith.constant 0 : i32
    return %c0_i32, %c0_i32_0 : i32, i32
  }
  func.func @transform_6(%arg0: i32) -> (i32, i32, i32) {
    %c0_i32 = arith.constant 0 : i32
    %c0_i32_0 = arith.constant 0 : i32
    %c0_i32_1 = arith.constant 0 : i32
    return %arg0, %c0_i32, %c0_i32_0 : i32, i32, i32
  }
}

</mosaic_0001>

<llo_original>
// kernel: tpu_custom_call.1
$region0: #{tpu_custom_call.1}
  #allocation0 [shape = 'u32[]', space=smem, size = 0x4, offset = 0x4, fixed_abs, tag = 'smem constant byte address 0x4 - core index']
  #allocation1 [shape = 'u32[144,128]{1,0:T(1,128)}', space=vmem, size = 0x12000, scoped, tag = 'internal scratch']
  %s0 = inlined_call_operand.hbm [shape: f32[2,4,256], index: 0, kind: input, shape index: {}]
  %s1 = inlined_call_operand.vmem [shape: f32[4,36], index: 1, kind: input, shape index: {}]
  %s2 = inlined_call_operand.vmem [shape: f32[4,1], index: 2, kind: input, shape index: {}]
  %s3 = inlined_call_operand.vmem [shape: f32[4,36], index: 3, kind: input, shape index: {}]
  %s4 = inlined_call_operand.vmem [shape: f32[4,1], index: 4, kind: input, shape index: {}]
  %s5 = inlined_call_operand.hbm [shape: f32[9,256], index: 5, kind: input, shape index: {}]
  %s6 = inlined_call_operand.hbm [shape: f32[2,4,256], index: 6, kind: output, shape index: {}]
  %s7 = sld [smem:[#allocation0]]
  $region65: #{tpu_custom_call.1} parent=0
    _
  %s9 = ssub.s32 1, %s7
  %s10 = scalar_select 0, %s9, %s7
  $region1: #{tpu_custom_call.1} parent=0
    #allocation2 [shape = 'u8[8192]{0}', space=vmem, size = 0x2000, scoped, tag = 'input window, operand 0']
    #allocation3 [shape = 's32[2]{0}', space=sflag, size = 0x8, scoped, tag = 'scoped memory for tpu_custom_call.1']
    #allocation4 [shape = 's32[2]{0}', space=sflag, size = 0x8, scoped, tag = 'scoped memory for tpu_custom_call.1']
    #allocation5 [shape = 'u8[16384]{0}', space=vmem, size = 0x4000, scoped, tag = 'input window, operand 5, single buffered']
    #allocation6 [shape = 's32[1]{0}', space=sflag, size = 0x4, scoped, tag = 'scoped memory for tpu_custom_call.1']
    #allocation7 [shape = 'u8[8192]{0}', space=vmem, size = 0x2000, scoped, tag = 'output window, operand 0']
    %11 = vsyncpa [#allocation3], 0
    %s12 = scalar_lea.sflag [#allocation3], 1
    %13 = vsyncpa %s12, 0
    %14 = vsyncpa [#allocation6], 0
    %15 = vsyncpa [#allocation4], 0
    %s16 = scalar_lea.sflag [#allocation4], 1
    %17 = vsyncpa %s16, 0
    loop: start=0, step=1, limit=4
    $region2: #{tpu_custom_call.1} parent=1 // loop_pre_header
      _
    $region3: #{tpu_custom_call.1} parent=1 // loop_header
      %s19 = sphi 0, %s23
      %p20 = scmp.ge.s32.totalorder %s19, 4
      %s29 = sphi 0, %s31
      %s32 = sphi 0, %s29
      %s33 = sphi 0, %s32
      %s49 = sphi 0, %s33
      %s53 = sphi 0, %s53
      %s55 = sphi 0, %s53
      %s56 = sphi 0, %s55
      %s70 = sphi 0, %s56
      %s74 = sphi 0, %s74
      %s76 = sphi 0, %s74
      %s77 = sphi 0, %s76
      %s91 = sphi 0, %s77
      %s95 = sphi 0, %s95
      %s97 = sphi 0, %s95
      %s98 = sphi 0, %s97
      %s112 = sphi 0, %s98
      %s116 = sphi 0, %s116
      %s118 = sphi 0, %s116
      %s119 = sphi 0, %s118
      %s133 = sphi 0, %s119
      %s137 = sphi 0, %s137
      %s139 = sphi 0, %s137
      %s140 = sphi 0, %s139
      %s154 = sphi 0, %s140
      %s160 = sphi 0, %s162
      %s163 = sphi 0, %s160
      %s164 = sphi 0, %s163
      %s180 = sphi 0, %s164
    $region4: #{tpu_custom_call.1} parent=1 // loop_header_branch
      %22 = sbr.rel (%p20) target = $region8
    $region5: #{tpu_custom_call.1} parent=1 // loop_body
      %s24 = ssub.s32 %s19, 1
      %s25 = ssub.s32 %s19, 2
      %s26 = sadd.s32 %s19, 1
      %s27 = ssub.s32 %s19, %s26
      %p28 = scmp.eq.s32.totalorder %s27, 0
      %s30 = sadd.s32 %s29, 1
      %s31 = scalar_select %p28, %s29, %s30
      %p34 = pneg %p28
      %p35 = scmp.eq.s32.totalorder %s19, 1
      %p36 = por %p34, %p35
      %p37 = scmp.ne.s32.totalorder %s29, %s32
      %p38 = scmp.eq.s32.totalorder %s19, 0
      %p39 = por %p37, %p38
      %p40 = scmp.ne.s32.totalorder %s29, %s32
      %p41 = scmp.eq.s32.totalorder %s24, 1
      %p42 = por %p40, %p41
      %p43 = scmp.ne.s32.totalorder %s32, %s33
      %p44 = scmp.eq.s32.totalorder %s24, 0
      %p45 = por %p43, %p44
      %p46 = scmp.ne.s32.totalorder %s32, %s33
      %p47 = scmp.eq.s32.totalorder %s25, 1
      %p48 = por %p46, %p47
      %p50 = scmp.ne.s32.totalorder %s33, %s49
      %p51 = scmp.eq.s32.totalorder %s25, 0
      %p52 = por %p50, %p51
      %s54 = sadd.s32 %s53, 1
      %p57 = scmp.eq.s32.totalorder %s19, 1
      %p58 = scmp.ne.s32.totalorder %s53, %s55
      %p59 = scmp.eq.s32.totalorder %s19, 0
      %p60 = por %p58, %p59
      %p61 = scmp.ne.s32.totalorder %s53, %s55
      %p62 = scmp.eq.s32.totalorder %s24, 1
      %p63 = por %p61, %p62
      %p64 = scmp.ne.s32.totalorder %s55, %s56
      %p65 = scmp.eq.s32.totalorder %s24, 0
      %p66 = por %p64, %p65
      %p67 = scmp.ne.s32.totalorder %s55, %s56
      %p68 = scmp.eq.s32.totalorder %s25, 1
      %p69 = por %p67, %p68
      %p71 = scmp.ne.s32.totalorder %s56, %s70
      %p72 = scmp.eq.s32.totalorder %s25, 0
      %p73 = por %p71, %p72
      %s75 = sadd.s32 %s74, 1
      %p78 = scmp.eq.s32.totalorder %s19, 1
      %p79 = scmp.ne.s32.totalorder %s74, %s76
      %p80 = scmp.eq.s32.totalorder %s19, 0
      %p81 = por %p79, %p80
      %p82 = scmp.ne.s32.totalorder %s74, %s76
      %p83 = scmp.eq.s32.totalorder %s24, 1
      %p84 = por %p82, %p83
      %p85 = scmp.ne.s32.totalorder %s76, %s77
      %p86 = scmp.eq.s32.totalorder %s24, 0
      %p87 = por %p85, %p86
      %p88 = scmp.ne.s32.totalorder %s76, %s77
      %p89 = scmp.eq.s32.totalorder %s25, 1
      %p90 = por %p88, %p89
      %p92 = scmp.ne.s32.totalorder %s77, %s91
      %p93 = scmp.eq.s32.totalorder %s25, 0
      %p94 = por %p92, %p93
      %s96 = sadd.s32 %s95, 1
      %p99 = scmp.eq.s32.totalorder %s19, 1
      %p100 = scmp.ne.s32.totalorder %s95, %s97
      %p101 = scmp.eq.s32.totalorder %s19, 0
      %p102 = por %p100, %p101
      %p103 = scmp.ne.s32.totalorder %s95, %s97
      %p104 = scmp.eq.s32.totalorder %s24, 1
      %p105 = por %p103, %p104
      %p106 = scmp.ne.s32.totalorder %s97, %s98
      %p107 = scmp.eq.s32.totalorder %s24, 0
      %p108 = por %p106, %p107
      %p109 = scmp.ne.s32.totalorder %s97, %s98
      %p110 = scmp.eq.s32.totalorder %s25, 1
      %p111 = por %p109, %p110
      %p113 = scmp.ne.s32.totalorder %s98, %s112
      %p114 = scmp.eq.s32.totalorder %s25, 0
      %p115 = por %p113, %p114
      %s117 = sadd.s32 %s116, 1
      %p120 = scmp.eq.s32.totalorder %s19, 1
      %p121 = scmp.ne.s32.totalorder %s116, %s118
      %p122 = scmp.eq.s32.totalorder %s19, 0
      %p123 = por %p121, %p122
      %p124 = scmp.ne.s32.totalorder %s116, %s118
      %p125 = scmp.eq.s32.totalorder %s24, 1
      %p126 = por %p124, %p125
      %p127 = scmp.ne.s32.totalorder %s118, %s119
      %p128 = scmp.eq.s32.totalorder %s24, 0
      %p129 = por %p127, %p128
      %p130 = scmp.ne.s32.totalorder %s118, %s119
      %p131 = scmp.eq.s32.totalorder %s25, 1
      %p132 = por %p130, %p131
      %p134 = scmp.ne.s32.totalorder %s119, %s133
      %p135 = scmp.eq.s32.totalorder %s25, 0
      %p136 = por %p134, %p135
      %s138 = sadd.s32 %s137, 1
      %p141 = scmp.eq.s32.totalorder %s19, 1
      %p142 = scmp.ne.s32.totalorder %s137, %s139
      %p143 = scmp.eq.s32.totalorder %s19, 0
      %p144 = por %p142, %p143
      %p145 = scmp.ne.s32.totalorder %s137, %s139
      %p146 = scmp.eq.s32.totalorder %s24, 1
      %p147 = por %p145, %p146
      %p148 = scmp.ne.s32.totalorder %s139, %s140
      %p149 = scmp.eq.s32.totalorder %s24, 0
      %p150 = por %p148, %p149
      %p151 = scmp.ne.s32.totalorder %s139, %s140
      %p152 = scmp.eq.s32.totalorder %s25, 1
      %p153 = por %p151, %p152
      %p155 = scmp.ne.s32.totalorder %s140, %s154
      %p156 = scmp.eq.s32.totalorder %s25, 0
      %p157 = por %p155, %p156
      %s158 = ssub.s32 %s19, %s26
      %p159 = scmp.eq.s32.totalorder %s158, 0
      %s161 = sadd.s32 %s160, 1
      %s162 = scalar_select %p159, %s160, %s161
      %p165 = pneg %p159
      %p166 = scmp.eq.s32.totalorder %s19, 1
      %p167 = por %p165, %p166
      %p168 = scmp.ne.s32.totalorder %s160, %s163
      %p169 = scmp.eq.s32.totalorder %s19, 0
      %p170 = por %p168, %p169
      %p171 = scmp.ne.s32.totalorder %s160, %s163
      %p172 = scmp.eq.s32.totalorder %s24, 1
      %p173 = por %p171, %p172
      %p174 = scmp.ne.s32.totalorder %s163, %s164
      %p175 = scmp.eq.s32.totalorder %s24, 0
      %p176 = por %p174, %p175
      %p177 = scmp.ne.s32.totalorder %s163, %s164
      %p178 = scmp.eq.s32.totalorder %s25, 1
      %p179 = por %p177, %p178
      %p181 = scmp.ne.s32.totalorder %s164, %s180
      %p182 = scmp.eq.s32.totalorder %s25, 0
      %p183 = por %p181, %p182
      %p184 = scmp.le.s32.totalorder 1, %s19
      %p185 = scmp.lt.s32.totalorder %s19, 3
      %p186 = pnand %p184, %p185
      %p187 = pneg %p186
      // Predicated region
      $region9: #{tpu_custom_call.1} parent=5 // pred_check
        _
      $region10: #{tpu_custom_call.1} parent=5 // pred_check_branch
        %189 = sbr.rel (%p186) target = $region12
      $region11: #{tpu_custom_call.1} parent=5 // pred_region
        %s190 = ssub.s32 %s19, 1
        // Predicated region
        $region13: #{tpu_custom_call.1} parent=11 // pred_check
          %p191 = pneg %p66
        $region14: #{tpu_custom_call.1} parent=11 // pred_check_branch
          %193 = sbr.rel (%p191) target = $region16
        $region15: #{tpu_custom_call.1} parent=11 // pred_region
          _
        $region16: #{tpu_custom_call.1} parent=11 // pred_fallthru
          _
        // Predicated region
        $region17: #{tpu_custom_call.1} parent=11 // pred_check
          %p194 = pneg %p87
        $region18: #{tpu_custom_call.1} parent=11 // pred_check_branch
          %196 = sbr.rel (%p194) target = $region20
        $region19: #{tpu_custom_call.1} parent=11 // pred_region
          _
        $region20: #{tpu_custom_call.1} parent=11 // pred_fallthru
          _
        // Predicated region
        $region21: #{tpu_custom_call.1} parent=11 // pred_check
          %p197 = pneg %p108
        $region22: #{tpu_custom_call.1} parent=11 // pred_check_branch
          %199 = sbr.rel (%p197) target = $region24
        $region23: #{tpu_custom_call.1} parent=11 // pred_region
          _
        $region24: #{tpu_custom_call.1} parent=11 // pred_fallthru
          _
        // Predicated region
        $region25: #{tpu_custom_call.1} parent=11 // pred_check
          %p200 = pneg %p129
        $region26: #{tpu_custom_call.1} parent=11 // pred_check_branch
          %202 = sbr.rel (%p200) target = $region28
        $region27: #{tpu_custom_call.1} parent=11 // pred_region
          _
        $region28: #{tpu_custom_call.1} parent=11 // pred_fallthru
          _
        // Predicated region
        $region29: #{tpu_custom_call.1} parent=11 // pred_check
          %p203 = pneg %p150
        $region30: #{tpu_custom_call.1} parent=11 // pred_check_branch
          %205 = sbr.rel (%p203) target = $region32
        $region31: #{tpu_custom_call.1} parent=11 // pred_region
          %s207 = ssub.s32 512, 512
          %208 = vsyncadd [#allocation6], %s207
          %s209 = sshll.u32 [#allocation5], 4
          %s210 = int_to_ptr.vmem [resolvable:$true] %s209
          %215 = dma.hbm_to_vmem [thread:$0]  %s5, 512, %s210, [#allocation6], 256, 256, 16
        $region32: #{tpu_custom_call.1} parent=11 // pred_fallthru
          _
      $region12: #{tpu_custom_call.1} parent=5 // pred_fallthru
        _
      %p216 = scmp.lt.s32.totalorder %s19, 2
      // Predicated region
      $region33: #{tpu_custom_call.1} parent=5 // pred_check
        %p217 = pneg %p216
      $region34: #{tpu_custom_call.1} parent=5 // pred_check_branch
        %219 = sbr.rel (%p217) target = $region36
      $region35: #{tpu_custom_call.1} parent=5 // pred_region
        // Predicated region
        $region37: #{tpu_custom_call.1} parent=35 // pred_check
          %p220 = pneg %p39
        $region38: #{tpu_custom_call.1} parent=35 // pred_check_branch
          %222 = sbr.rel (%p220) target = $region40
        $region39: #{tpu_custom_call.1} parent=35 // pred_region
          %s223 = sand.u32 %s29, 1
          %s224 = scalar_lea.sflag [#allocation3], %s223
          %s225 = sand.u32 %s29, 1
          %s226 = smul.addr %s225, 8
          %s227 = scalar_lea.vmem [#allocation2], %s226
          %s229 = ssub.s32 128, 128
          %230 = vsyncadd %s224, %s229
          %s231 = smul.addr %s19, 2
          %s232 = smul.addr %s231, 64
          %s233 = scalar_lea.hbm %s0, %s232
          %s235 = sshll.u32 %s227, 4
          %s236 = int_to_ptr.vmem [resolvable:$true] %s235
          %238 = dma.hbm_to_vmem [thread:$0]  %s233, 128, %s236, %s224
        $region40: #{tpu_custom_call.1} parent=35 // pred_fallthru
          _
      $region36: #{tpu_custom_call.1} parent=5 // pred_fallthru
        _
      %p239 = scmp.le.s32.totalorder 1, %s19
      %p240 = scmp.lt.s32.totalorder %s19, 3
      %p241 = pnand %p239, %p240
      %p242 = pneg %p241
      // Predicated region
      $region41: #{tpu_custom_call.1} parent=5 // pred_check
        _
      $region42: #{tpu_custom_call.1} parent=5 // pred_check_branch
        %244 = sbr.rel (%p241) target = $region44
      $region43: #{tpu_custom_call.1} parent=5 // pred_region
        %s245 = ssub.s32 %s19, 1
        %s246 = sand.u32 %s32, 1
        %s247 = scalar_lea.sflag [#allocation3], %s246
        %s248 = sand.u32 %s32, 1
        %s249 = smul.addr %s248, 8
        %s250 = scalar_lea.vmem [#allocation2], %s249
        // Predicated region
        $region45: #{tpu_custom_call.1} parent=43 // pred_check
          %p251 = pneg %p45
        $region46: #{tpu_custom_call.1} parent=43 // pred_check_branch
          %253 = sbr.rel (%p251) target = $region48
        $region47: #{tpu_custom_call.1} parent=43 // pred_region
          %254 = dma.done %s247, 128
        $region48: #{tpu_custom_call.1} parent=43 // pred_fallthru
          _
        // Predicated region
        $region49: #{tpu_custom_call.1} parent=43 // pred_check
          %p255 = pneg %p150
        $region50: #{tpu_custom_call.1} parent=43 // pred_check_branch
          %257 = sbr.rel (%p255) target = $region52
        $region51: #{tpu_custom_call.1} parent=43 // pred_region
          %258 = dma.done [#allocation6], 512
        $region52: #{tpu_custom_call.1} parent=43 // pred_fallthru
          _
        %s259 = sand.u32 %s32, 1
        %s260 = scalar_lea.sflag [#allocation3], %s259
        %s261 = sand.u32 %s32, 1
        %s262 = smul.addr %s261, 8
        %s263 = scalar_lea.vmem [#allocation2], %s262
        %p264 = pneg %p45
        %p265 = pneg %p42
        %p266 = pneg %p66
        %p267 = pneg %p63
        %p268 = pneg %p87
        %p269 = pneg %p84
        %p270 = pneg %p108
        %p271 = pneg %p105
        %p272 = pneg %p129
        %p273 = pneg %p126
        %p274 = pneg %p150
        %p275 = pneg %p147
        %p276 = pneg %p176
        %p277 = pneg %p173
        %s278 = sand.u32 %s163, 1
        %s279 = scalar_lea.sflag [#allocation4], %s278
        %s280 = sand.u32 %s163, 1
        %s281 = smul.addr %s280, 8
        %s282 = scalar_lea.vmem [#allocation7], %s281
        %v283 = vld [vmem:[%s250] sm:$0xff]
        %v285 = vcombine.high %v283, %v283
        %286 = vrot.lane.b32.xlu0 %v285, 17
        %v287 = vpop.permute.xlu0 %286
        %289 = vrot.lane.b32.xlu0 %v283, 17
        %v290 = vpop.permute.xlu0 %289
        %vm291 = vcmask 138240
        %v292 = vsel %vm291, %v290, %v287
        %v295 = vsel %vm291, %v287, %v290
        %v296 = vld [vmem:[#allocation5] ss:$8 sm:$0x3]
        %v298 = vlaneseq
        %v299 = vshrl.u32 %v298, 7
        %v300 = vsub.s32 0, %v299
        %v301 = vrot.slane %v296, %v300
        %v302 = vlaneseq
        %v303 = vshrl.u32 %v302, 7
        %v304 = vsub.s32 1, %v303
        %v305 = vrot.slane %v296, %v304
        %v308 = vmul.f32 %v295, %v301
        %v309 = vmul.f32 %v292, %v305
        %310 = vrot.lane.b32.xlu0 %v285, 16
        %v311 = vpop.permute.xlu0 %310
        %313 = vrot.lane.b32.xlu0 %v283, 16
        %v314 = vpop.permute.xlu0 %313
        %vm315 = vcmask 130048
        %v316 = vsel %vm315, %v314, %v311
        %v319 = vsel %vm315, %v311, %v314
        %s320 = scalar_lea.vmem [#allocation5], 1
        %v321 = vld [vmem:[%s320] ss:$8 sm:$0x3]
        %v323 = vlaneseq
        %v324 = vshrl.u32 %v323, 7
        %v325 = vsub.s32 0, %v324
        %v326 = vrot.slane %v321, %v325
        %v327 = vlaneseq
        %v328 = vshrl.u32 %v327, 7
        %v329 = vsub.s32 1, %v328
        %v330 = vrot.slane %v321, %v329
        %v333 = vmul.f32 %v319, %v326
        %v334 = vmul.f32 %v316, %v330
        %335 = vrot.lane.b32.xlu0 %v285, 15
        %v336 = vpop.permute.xlu0 %335
        %338 = vrot.lane.b32.xlu0 %v283, 15
        %v339 = vpop.permute.xlu0 %338
        %vm340 = vcmask 121856
        %v341 = vsel %vm340, %v339, %v336
        %v344 = vsel %vm340, %v336, %v339
        %s345 = scalar_lea.vmem [#allocation5], 2
        %v346 = vld [vmem:[%s345] ss:$8 sm:$0x3]
        %v348 = vlaneseq
        %v349 = vshrl.u32 %v348, 7
        %v350 = vsub.s32 0, %v349
        %v351 = vrot.slane %v346, %v350
        %v352 = vlaneseq
        %v353 = vshrl.u32 %v352, 7
        %v354 = vsub.s32 1, %v353
        %v355 = vrot.slane %v346, %v354
        %v358 = vmul.f32 %v344, %v351
        %v359 = vmul.f32 %v341, %v355
        %360 = vrot.lane.b32.xlu0 %v285, 1
        %v361 = vpop.permute.xlu0 %360
        %363 = vrot.lane.b32.xlu0 %v283, 1
        %v364 = vpop.permute.xlu0 %363
        %vm365 = vcmask 7168
        %v366 = vsel %vm365, %v364, %v361
        %v369 = vsel %vm365, %v361, %v364
        %s370 = scalar_lea.vmem [#allocation5], 3
        %v371 = vld [vmem:[%s370] ss:$8 sm:$0x3]
        %v373 = vlaneseq
        %v374 = vshrl.u32 %v373, 7
        %v375 = vsub.s32 0, %v374
        %v376 = vrot.slane %v371, %v375
        %v377 = vlaneseq
        %v378 = vshrl.u32 %v377, 7
        %v379 = vsub.s32 1, %v378
        %v380 = vrot.slane %v371, %v379
        %v383 = vmul.f32 %v369, %v376
        %v384 = vmul.f32 %v366, %v380
        %385 = vrot.lane.b32.xlu0 %v283, 127
        %v386 = vpop.permute.xlu0 %385
        %387 = vrot.lane.b32.xlu0 %v285, 127
        %v388 = vpop.permute.xlu0 %387
        %vm389 = vcmask 1039360
        %v390 = vsel %vm389, %v386, %v388
        %v394 = vsel %vm389, %v388, %v386
        %s395 = scalar_lea.vmem [#allocation5], 5
        %v396 = vld [vmem:[%s395] ss:$8 sm:$0x3]
        %v398 = vlaneseq
        %v399 = vshrl.u32 %v398, 7
        %v400 = vsub.s32 0, %v399
        %v401 = vrot.slane %v396, %v400
        %v402 = vlaneseq
        %v403 = vshrl.u32 %v402, 7
        %v404 = vsub.s32 1, %v403
        %v405 = vrot.slane %v396, %v404
        %v408 = vmul.f32 %v390, %v401
        %v409 = vmul.f32 %v394, %v405
        %410 = vrot.lane.b32.xlu0 %v283, 113
        %v411 = vpop.permute.xlu0 %410
        %412 = vrot.lane.b32.xlu0 %v285, 113
        %v413 = vpop.permute.xlu0 %412
        %vm414 = vcmask 924672
        %v415 = vsel %vm414, %v411, %v413
        %v419 = vsel %vm414, %v413, %v411
        %s420 = scalar_lea.vmem [#allocation5], 6
        %v421 = vld [vmem:[%s420] ss:$8 sm:$0x3]
        %v423 = vlaneseq
        %v424 = vshrl.u32 %v423, 7
        %v425 = vsub.s32 0, %v424
        %v426 = vrot.slane %v421, %v425
        %v427 = vlaneseq
        %v428 = vshrl.u32 %v427, 7
        %v429 = vsub.s32 1, %v428
        %v430 = vrot.slane %v421, %v429
        %v433 = vmul.f32 %v415, %v426
        %v434 = vmul.f32 %v419, %v430
        %435 = vrot.lane.b32.xlu0 %v283, 112
        %v436 = vpop.permute.xlu0 %435
        %437 = vrot.lane.b32.xlu0 %v285, 112
        %v438 = vpop.permute.xlu0 %437
        %vm439 = vcmask 916480
        %v440 = vsel %vm439, %v436, %v438
        %v444 = vsel %vm439, %v438, %v436
        %s445 = scalar_lea.vmem [#allocation5], 7
        %v446 = vld [vmem:[%s445] ss:$8 sm:$0x3]
        %v448 = vlaneseq
        %v449 = vshrl.u32 %v448, 7
        %v450 = vsub.s32 0, %v449
        %v451 = vrot.slane %v446, %v450
        %v452 = vlaneseq
        %v453 = vshrl.u32 %v452, 7
        %v454 = vsub.s32 1, %v453
        %v455 = vrot.slane %v446, %v454
        %v458 = vmul.f32 %v440, %v451
        %v459 = vmul.f32 %v444, %v455
        %460 = vrot.lane.b32.xlu0 %v283, 111
        %v461 = vpop.permute.xlu0 %460
        %462 = vrot.lane.b32.xlu0 %v285, 111
        %v463 = vpop.permute.xlu0 %462
        %vm464 = vcmask 908288
        %v465 = vsel %vm464, %v461, %v463
        %v469 = vsel %vm464, %v463, %v461
        %s470 = scalar_lea.vmem [#allocation5], 16
        %v471 = vld [vmem:[%s470] ss:$8 sm:$0x3]
        %v473 = vlaneseq
        %v474 = vshrl.u32 %v473, 7
        %v475 = vsub.s32 0, %v474
        %v476 = vrot.slane %v471, %v475
        %v477 = vlaneseq
        %v478 = vshrl.u32 %v477, 7
        %v479 = vsub.s32 1, %v478
        %v480 = vrot.slane %v471, %v479
        %v483 = vmul.f32 %v465, %v476
        %v484 = vmul.f32 %v469, %v480
        %v487 = vrot.slane %v333, 4
        %v488 = vrot.slane %v334, 4
        %v493 = vrot.slane %v383, 4
        %v494 = vrot.slane %v384, 4
        %v500 = vrot.slane %v408, 4
        %v501 = vrot.slane %v409, 4
        %v506 = vrot.slane %v458, 4
        %v507 = vrot.slane %v459, 4
        %vm510 = vcmask 1043456
        %v511 = vsel %vm510, %v308, %v487
        %v512 = vsel %vm510, %v309, %v488
        %v513 = vsel %vm510, %v358, %v493
        %v514 = vsel %vm510, %v359, %v494
        %v515 = vsel %vm510, %v283, %v500
        %v516 = vsel %vm510, %v285, %v501
        %v517 = vsel %vm510, %v433, %v506
        %v518 = vsel %vm510, %v434, %v507
        %v519 = vld [vmem:[%s1] sm:$0xf]
        %v520 = vld [vmem:[%s2] sm:$0xf]
        %522 = vset.pattern.permute.xlu0 0
        %523 = vperm.xlu0 %522, %v520
        %v524 = vpop.permute.xlu0 %523
        %vm526 = vcmask 293888
        %v528 = vsel %vm526, %v519, 0
        %v531 = vsel %vm510, %v483, 0
        %v534 = vsel %vm510, %v484, 0
        %536 = vmatprep.subr.mxu0 0.0
        %537 = vmatpush1.msra.mxu0 0.0
        %538 = vmatprep.subr.mxu0 0.0
        %539 = vmatpush1.msra.mxu0 0.0
        %540 = vmatprep.subr.mxu0 0.0
        %541 = vmatpush1.msra.mxu0 0.0
        %542 = vmatprep.subr.mxu0 0.0
        %543 = vmatpush1.msra.mxu0 0.0
        %544 = vmatprep.subr.mxu0 0.0
        %545 = vmatpush1.msra.mxu0 0.0
        %546 = vmatprep.subr.mxu0 0.0
        %547 = vmatpush1.msra.mxu0 0.0
        %548 = vmatprep.subr.mxu0 0.0
        %549 = vmatpush1.msra.mxu0 0.0
        %550 = vmatprep.subr.mxu0 0.0
        %551 = vmatpush1.msra.mxu0 0.0
        %552 = vmatprep.subr.mxu0 0.0
        %553 = vmatpush1.msra.mxu0 0.0
        %554 = vmatprep.subr.mxu0 0.0
        %555 = vmatpush1.msra.mxu0 0.0
        %556 = vmatprep.subr.mxu0 0.0
        %557 = vmatpush1.msra.mxu0 0.0
        %558 = vmatprep.subr.mxu0 %v534
        %559 = vmatpush1.msra.mxu0 %v531
        %560 = vmatprep.subr.mxu0 %v518
        %561 = vmatpush1.msra.mxu0 %v517
        %562 = vmatprep.subr.mxu0 %v516
        %563 = vmatpush1.msra.mxu0 %v515
        %564 = vmatprep.subr.mxu0 %v514
        %565 = vmatpush1.msra.mxu0 %v513
        %566 = vmatprep.subr.mxu0 %v512
        %567 = vmatpush1.msra.mxu0 %v511
        %568 = vmatprep.subr.mxu0 0.0
        %569 = vmatpush2.msra.mxu0 0.0
        %570 = vmatprep.subr.mxu0 0.0
        %571 = vmatpush2.msra.mxu0 0.0
        %572 = vmatprep.subr.mxu0 0.0
        %573 = vmatpush2.msra.mxu0 0.0
        %574 = vmatprep.subr.mxu0 0.0
        %575 = vmatpush2.msra.mxu0 0.0
        %576 = vmatprep.subr.mxu0 0.0
        %577 = vmatpush2.msra.mxu0 0.0
        %578 = vmatprep.subr.mxu0 0.0
        %579 = vmatpush2.msra.mxu0 0.0
        %580 = vmatprep.subr.mxu0 0.0
        %581 = vmatpush2.msra.mxu0 0.0
        %582 = vmatprep.subr.mxu0 0.0
        %583 = vmatpush2.msra.mxu0 0.0
        %584 = vmatprep.subr.mxu0 0.0
        %585 = vmatpush2.msra.mxu0 0.0
        %586 = vmatprep.subr.mxu0 0.0
        %587 = vmatpush2.msra.mxu0 0.0
        %588 = vmatprep.subr.mxu0 0.0
        %589 = vmatpush2.msra.mxu0 0.0
        %590 = vmatprep.subr.mxu0 0.0
        %591 = vmatpush2.msra.mxu0 0.0
        %592 = vmatprep.subr.mxu0 0.0
        %593 = vmatpush2.msra.mxu0 0.0
        %594 = vmatprep.subr.mxu0 0.0
        %595 = vmatpush2.msra.mxu0 0.0
        %596 = vmatprep.subr.mxu0 0.0
        %597 = vmatpush2.msra.mxu0 0.0
        %598 = vmatprep.subr.mxu0 0.0
        %599 = vmatpush2.msra.mxu0 0.0
        %600 = vmatprep.mubr.f32.mxu0 0.0
        %601 = vmatmul.mubr.f32.gmra.mxu0 %v528
        %v602 = vpop.f32.mrf.mxu0
        %v603 = vadd.f32 %v524, %v602
        %v604 = vpop.f32.mrf.mxu0
        %v605 = vadd.f32 %v524, %v604
        %606 = vdwg.mxu0
        %v607 = vmax.f32 %v603, 0.0
        %v608 = vmax.f32 %v605, 0.0
        %v609 = vmin.f32 %v607, 6.0
        %v610 = vmin.f32 %v608, 6.0
        %612 = vrot.lane.b32.xlu0 %v610, 17
        %v613 = vpop.permute.xlu0 %612
        %616 = vrot.lane.b32.xlu0 %v609, 17
        %v617 = vpop.permute.xlu0 %616
        %v618 = vsel %vm291, %v617, %v613
        %v621 = vsel %vm291, %v613, %v617
        %v622 = vmul.f32 %v621, %v301
        %v623 = vmul.f32 %v618, %v305
        %624 = vrot.lane.b32.xlu0 %v610, 16
        %v625 = vpop.permute.xlu0 %624
        %627 = vrot.lane.b32.xlu0 %v609, 16
        %v628 = vpop.permute.xlu0 %627
        %v629 = vsel %vm315, %v628, %v625
        %v632 = vsel %vm315, %v625, %v628
        %v633 = vmul.f32 %v632, %v326
        %v634 = vmul.f32 %v629, %v330
        %635 = vrot.lane.b32.xlu0 %v610, 15
        %v636 = vpop.permute.xlu0 %635
        %638 = vrot.lane.b32.xlu0 %v609, 15
        %v639 = vpop.permute.xlu0 %638
        %v640 = vsel %vm340, %v639, %v636
        %v643 = vsel %vm340, %v636, %v639
        %v644 = vmul.f32 %v643, %v351
        %v645 = vmul.f32 %v640, %v355
        %646 = vrot.lane.b32.xlu0 %v610, 1
        %v647 = vpop.permute.xlu0 %646
        %649 = vrot.lane.b32.xlu0 %v609, 1
        %v650 = vpop.permute.xlu0 %649
        %v651 = vsel %vm365, %v650, %v647
        %v654 = vsel %vm365, %v647, %v650
        %v655 = vmul.f32 %v654, %v376
        %v656 = vmul.f32 %v651, %v380
        %657 = vrot.lane.b32.xlu0 %v609, 127
        %v658 = vpop.permute.xlu0 %657
        %659 = vrot.lane.b32.xlu0 %v610, 127
        %v660 = vpop.permute.xlu0 %659
        %v661 = vsel %vm389, %v658, %v660
        %v665 = vsel %vm389, %v660, %v658
        %v666 = vmul.f32 %v661, %v401
        %v667 = vmul.f32 %v665, %v405
        %668 = vrot.lane.b32.xlu0 %v609, 113
        %v669 = vpop.permute.xlu0 %668
        %670 = vrot.lane.b32.xlu0 %v610, 113
        %v671 = vpop.permute.xlu0 %670
        %v672 = vsel %vm414, %v669, %v671
        %v676 = vsel %vm414, %v671, %v669
        %v677 = vmul.f32 %v672, %v426
        %v678 = vmul.f32 %v676, %v430
        %679 = vrot.lane.b32.xlu0 %v609, 112
        %v680 = vpop.permute.xlu0 %679
        %681 = vrot.lane.b32.xlu0 %v610, 112
        %v682 = vpop.permute.xlu0 %681
        %v683 = vsel %vm439, %v680, %v682
        %v687 = vsel %vm439, %v682, %v680
        %v688 = vmul.f32 %v683, %v451
        %v689 = vmul.f32 %v687, %v455
        %690 = vrot.lane.b32.xlu0 %v609, 111
        %v691 = vpop.permute.xlu0 %690
        %692 = vrot.lane.b32.xlu0 %v610, 111
        %v693 = vpop.permute.xlu0 %692
        %v694 = vsel %vm464, %v691, %v693
        %v698 = vsel %vm464, %v693, %v691
        %v699 = vmul.f32 %v694, %v476
        %v700 = vmul.f32 %v698, %v480
        %v703 = vrot.slane %v633, 4
        %v704 = vrot.slane %v634, 4
        %v709 = vrot.slane %v655, 4
        %v710 = vrot.slane %v656, 4
        %v715 = vrot.slane %v666, 4
        %v716 = vrot.slane %v667, 4
        %v721 = vrot.slane %v688, 4
        %v722 = vrot.slane %v689, 4
        %v725 = vsel %vm510, %v622, %v703
        %v726 = vsel %vm510, %v623, %v704
        %v727 = vsel %vm510, %v644, %v709
        %v728 = vsel %vm510, %v645, %v710
        %v729 = vsel %vm510, %v609, %v715
        %v730 = vsel %vm510, %v610, %v716
        %v731 = vsel %vm510, %v677, %v721
        %v732 = vsel %vm510, %v678, %v722
        %v733 = vld [vmem:[%s3] sm:$0xf]
        %v734 = vld [vmem:[%s4] sm:$0xf]
        %736 = vset.pattern.permute.xlu0 0
        %737 = vperm.xlu0 %736, %v734
        %v738 = vpop.permute.xlu0 %737
        %v741 = vsel %vm526, %v733, 0
        %v744 = vsel %vm510, %v699, 0
        %v747 = vsel %vm510, %v700, 0
        %749 = vmatprep.subr.mxu0 0.0
        %750 = vmatpush1.msra.mxu0 0.0
        %751 = vmatprep.subr.mxu0 0.0
        %752 = vmatpush1.msra.mxu0 0.0
        %753 = vmatprep.subr.mxu0 0.0
        %754 = vmatpush1.msra.mxu0 0.0
        %755 = vmatprep.subr.mxu0 0.0
        %756 = vmatpush1.msra.mxu0 0.0
        %757 = vmatprep.subr.mxu0 0.0
        %758 = vmatpush1.msra.mxu0 0.0
        %759 = vmatprep.subr.mxu0 0.0
        %760 = vmatpush1.msra.mxu0 0.0
        %761 = vmatprep.subr.mxu0 0.0
        %762 = vmatpush1.msra.mxu0 0.0
        %763 = vmatprep.subr.mxu0 0.0
        %764 = vmatpush1.msra.mxu0 0.0
        %765 = vmatprep.subr.mxu0 0.0
        %766 = vmatpush1.msra.mxu0 0.0
        %767 = vmatprep.subr.mxu0 0.0
        %768 = vmatpush1.msra.mxu0 0.0
        %769 = vmatprep.subr.mxu0 0.0
        %770 = vmatpush1.msra.mxu0 0.0
        %771 = vmatprep.subr.mxu0 %v747
        %772 = vmatpush1.msra.mxu0 %v744
        %773 = vmatprep.subr.mxu0 %v732
        %774 = vmatpush1.msra.mxu0 %v731
        %775 = vmatprep.subr.mxu0 %v730
        %776 = vmatpush1.msra.mxu0 %v729
        %777 = vmatprep.subr.mxu0 %v728
        %778 = vmatpush1.msra.mxu0 %v727
        %779 = vmatprep.subr.mxu0 %v726
        %780 = vmatpush1.msra.mxu0 %v725
        %781 = vmatprep.subr.mxu0 0.0
        %782 = vmatpush2.msra.mxu0 0.0
        %783 = vmatprep.subr.mxu0 0.0
        %784 = vmatpush2.msra.mxu0 0.0
        %785 = vmatprep.subr.mxu0 0.0
        %786 = vmatpush2.msra.mxu0 0.0
        %787 = vmatprep.subr.mxu0 0.0
        %788 = vmatpush2.msra.mxu0 0.0
        %789 = vmatprep.subr.mxu0 0.0
        %790 = vmatpush2.msra.mxu0 0.0
        %791 = vmatprep.subr.mxu0 0.0
        %792 = vmatpush2.msra.mxu0 0.0
        %793 = vmatprep.subr.mxu0 0.0
        %794 = vmatpush2.msra.mxu0 0.0
        %795 = vmatprep.subr.mxu0 0.0
        %796 = vmatpush2.msra.mxu0 0.0
        %797 = vmatprep.subr.mxu0 0.0
        %798 = vmatpush2.msra.mxu0 0.0
        %799 = vmatprep.subr.mxu0 0.0
        %800 = vmatpush2.msra.mxu0 0.0
        %801 = vmatprep.subr.mxu0 0.0
        %802 = vmatpush2.msra.mxu0 0.0
        %803 = vmatprep.subr.mxu0 0.0
        %804 = vmatpush2.msra.mxu0 0.0
        %805 = vmatprep.subr.mxu0 0.0
        %806 = vmatpush2.msra.mxu0 0.0
        %807 = vmatprep.subr.mxu0 0.0
        %808 = vmatpush2.msra.mxu0 0.0
        %809 = vmatprep.subr.mxu0 0.0
        %810 = vmatpush2.msra.mxu0 0.0
        %811 = vmatprep.subr.mxu0 0.0
        %812 = vmatpush2.msra.mxu0 0.0
        %813 = vmatprep.mubr.f32.mxu0 0.0
        %814 = vmatmul.mubr.f32.gmra.mxu0 %v741
        %v815 = vpop.f32.mrf.mxu0
        %v816 = vadd.f32 %v738, %v815
        %v817 = vpop.f32.mrf.mxu0
        %v818 = vadd.f32 %v738, %v817
        %819 = vdwg.mxu0
        %v820 = vadd.f32 %v816, %v283
        %v821 = vadd.f32 %v818, %v285
        %v822 = vmax.f32 %v820, 0.0
        %v823 = vmax.f32 %v821, 0.0
        %v824 = vmin.f32 %v822, 6.0
        %v825 = vmin.f32 %v823, 6.0
        %v828 = vcombine.low %v824, %v825
        %830 = vst [vmem:[%s282] sm:$0xff] %v828
        %s831 = sand.u32 %s163, 1
        %s832 = scalar_lea.sflag [#allocation4], %s831
        %s833 = sand.u32 %s163, 1
        %s834 = smul.addr %s833, 8
        %s835 = scalar_lea.vmem [#allocation7], %s834
        // Predicated region
        $region53: #{tpu_custom_call.1} parent=43 // pred_check
          %p836 = pneg %p173
        $region54: #{tpu_custom_call.1} parent=43 // pred_check_branch
          %838 = sbr.rel (%p836) target = $region56
        $region55: #{tpu_custom_call.1} parent=43 // pred_region
          %s840 = ssub.s32 128, 128
          %841 = vsyncadd %s832, %s840
          %s842 = smul.addr %s24, 2
          %s843 = smul.addr %s842, 64
          %s844 = scalar_lea.hbm %s6, %s843
          %s846 = sshll.u32 %s835, 4
          %s847 = int_to_ptr.vmem [resolvable:$true] %s846
          %849 = dma.vmem_to_hbm [thread:$0]  %s847, 128, %s844, %s832
        $region56: #{tpu_custom_call.1} parent=43 // pred_fallthru
          _
      $region44: #{tpu_custom_call.1} parent=5 // pred_fallthru
        _
      %p850 = scmp.le.s32.totalorder 2, %s19
      // Predicated region
      $region57: #{tpu_custom_call.1} parent=5 // pred_check
        %p851 = pneg %p850
      $region58: #{tpu_custom_call.1} parent=5 // pred_check_branch
        %853 = sbr.rel (%p851) target = $region60
      $region59: #{tpu_custom_call.1} parent=5 // pred_region
        %s854 = ssub.s32 %s19, 2
        // Predicated region
        $region61: #{tpu_custom_call.1} parent=59 // pred_check
          %p855 = pneg %p179
        $region62: #{tpu_custom_call.1} parent=59 // pred_check_branch
          %857 = sbr.rel (%p855) target = $region64
        $region63: #{tpu_custom_call.1} parent=59 // pred_region
          %s858 = sand.u32 %s164, 1
          %s859 = scalar_lea.sflag [#allocation4], %s858
          %s860 = sand.u32 %s164, 1
          %s861 = smul.addr %s860, 8
          %s862 = scalar_lea.vmem [#allocation7], %s861
          %863 = dma.done %s859, 128
        $region64: #{tpu_custom_call.1} parent=59 // pred_fallthru
          _
      $region60: #{tpu_custom_call.1} parent=5 // pred_fallthru
        _
    $region6: #{tpu_custom_call.1} parent=1 // loop_footer
      %s23 = sadd.s32 1, %s19
    $region7: #{tpu_custom_call.1} parent=1 // loop_footer_branch
      %18 = sbr.rel target = $region3
    $region8: #{tpu_custom_call.1} parent=1 // loop_exit
      _
    %864 = vsyncpa [#allocation3], 1
    %s865 = scalar_lea.sflag [#allocation3], 1
    %866 = vsyncpa %s865, 1
    %867 = vsyncpa [#allocation6], 1
    %868 = vsyncpa [#allocation4], 1
    %s869 = scalar_lea.sflag [#allocation4], 1
    %870 = vsyncpa %s869, 1

</llo_original>
